<compile_context>
chip_gen: v6e
topology: v6e:2x2x1
jax: 0.10.0
libtpu: 0.0.40
codegen_flags: <defaults>
</compile_context>

<pallas_src>
import functools

import jax
import jax.numpy as jnp
from jax import lax
from jax.experimental import pallas as pl
from jax.experimental.pallas import tpu as pltpu

_LANE = 128
_SUBLANE = 8


def _round_up(n, m):
    return ((n + m - 1) // m) * m


def _pad2d(a, rows, cols):
    r, c = a.shape
    return jnp.pad(a, ((0, rows - r), (0, cols - c)))


def _tide_encoder_kernel(x_ref, *refs, block_meta, fout_real, fout_pad,
                         layer_norm, eps):
    """Fused TiDE encoder: all residual blocks in one kernel invocation.

    refs = flattened per-block weight refs followed by the output ref.
    block_meta: tuple[bool] -> has_shortcut_linear per block.
    """
    out_ref = refs[-1]
    w = refs[:-1]

    x = x_ref[...]
    compute_dtype = x.dtype

    # Mask of valid (unpadded) output features, used only for the variance.
    need_mask = layer_norm and (fout_pad != fout_real)
    if need_mask:
        col = lax.broadcasted_iota(jnp.int32, (1, fout_pad), 1)
        feat_mask = col < fout_real

    i = 0
    for has_shortcut in block_meta:
        w1, b1, w2, b2 = w[i], w[i + 1], w[i + 2], w[i + 3]
        i += 4
        if has_shortcut:
            ws, bs = w[i], w[i + 1]
            i += 2
        if layer_norm:
            g, be = w[i], w[i + 1]
            i += 2

        # fc1 + ReLU   (MXU matmul, f32 accumulate)
        h = jnp.dot(x, w1[...], preferred_element_type=jnp.float32) + b1[...]
        h = jnp.maximum(h, 0.0).astype(compute_dtype)

        # fc2
        out = jnp.dot(h, w2[...], preferred_element_type=jnp.float32) + b2[...]

        # residual shortcut (Linear iff in_features != out_features)
        if has_shortcut:
            sc = jnp.dot(x, ws[...], preferred_element_type=jnp.float32) + bs[...]
        else:
            sc = x.astype(jnp.float32)
        out = out + sc

        # LayerNorm over the real feature axis (f32 math).
        if layer_norm:
            # Padded feature columns of `out` are exactly zero by construction,
            # so the sum over the padded axis equals the sum over real features.
            mean = jnp.sum(out, axis=-1, keepdims=True) * (1.0 / fout_real)
            centered = out - mean
            sq = centered * centered
            if need_mask:
                sq = jnp.where(feat_mask, sq, 0.0)
            var = jnp.sum(sq, axis=-1, keepdims=True) * (1.0 / fout_real)
            out = centered * lax.rsqrt(var + eps)
            # gamma is zero-padded -> padded output columns remain zero.
            out = out * g[...] + be[...]

        x = out.astype(compute_dtype)

    out_ref[...] = x.astype(out_ref.dtype)


def tide_encoder(x, params, layer_norm=True, eps=1e-5, tile_b=None):
    """Run the full TiDE encoder stack as one Pallas call.

    params: list of dicts with keys w1, b1, w2, b2, (ws, bs if shortcut),
            gamma, beta, has_shortcut_linear. Linear weights are (in, out).
    """
    B, Fin = x.shape
    Fhid = params[0]["w1"].shape[1]
    Fout = params[0]["w2"].shape[1]

    fin_p = _round_up(Fin, _LANE)
    fhid_p = _round_up(Fhid, _LANE)
    fout_p = _round_up(Fout, _LANE)

    if tile_b is None:
        # Batch tile: multiple of 8 sublanes; capped so double-buffered
        # activation tiles + resident weights stay well inside VMEM even on
        # v7x (64 MiB).  For wide real-world features, halve this on v7x.
        tile_b = min(_round_up(B, _SUBLANE), 512)
    b_p = _round_up(B, tile_b)

    x_p = _pad2d(x, b_p, fin_p)

    operands = [x_p]
    in_specs = [pl.BlockSpec((tile_b, fin_p), lambda i: (i, 0))]
    block_meta = []

    def _pinned(shape):
        return pl.BlockSpec(shape, lambda i: (0, 0))

    fin_cur_p = fin_p
    flops = 0
    for p in params:
        has_shortcut = bool(p["has_shortcut_linear"])
        block_meta.append(has_shortcut)

        w1 = _pad2d(p["w1"], fin_cur_p, fhid_p)
        b1 = _pad2d(p["b1"].reshape(1, -1), 1, fhid_p)
        w2 = _pad2d(p["w2"], fhid_p, fout_p)
        b2 = _pad2d(p["b2"].reshape(1, -1), 1, fout_p)
        operands += [w1, b1, w2, b2]
        in_specs += [_pinned((fin_cur_p, fhid_p)), _pinned((1, fhid_p)),
                     _pinned((fhid_p, fout_p)), _pinned((1, fout_p))]
        flops += 2 * b_p * (fin_cur_p * fhid_p + fhid_p * fout_p)

        if has_shortcut:
            ws = _pad2d(p["ws"], fin_cur_p, fout_p)
            bs = _pad2d(p["bs"].reshape(1, -1), 1, fout_p)
            operands += [ws, bs]
            in_specs += [_pinned((fin_cur_p, fout_p)), _pinned((1, fout_p))]
            flops += 2 * b_p * fin_cur_p * fout_p

        if layer_norm:
            g = _pad2d(p["gamma"].reshape(1, -1), 1, fout_p)
            be = _pad2d(p["beta"].reshape(1, -1), 1, fout_p)
            operands += [g, be]
            in_specs += [_pinned((1, fout_p)), _pinned((1, fout_p))]

        fin_cur_p = fout_p

    bytes_accessed = sum(int(op.size) * op.dtype.itemsize for op in operands)
    bytes_accessed += int(b_p) * int(fout_p) * x.dtype.itemsize

    kernel = functools.partial(
        _tide_encoder_kernel,
        block_meta=tuple(block_meta),
        fout_real=Fout,
        fout_pad=fout_p,
        layer_norm=layer_norm,
        eps=eps,
    )

    out_p = pl.pallas_call(
        kernel,
        out_shape=jax.ShapeDtypeStruct((b_p, fout_p), x.dtype),
        grid=(b_p // tile_b,),
        in_specs=in_specs,
        out_specs=pl.BlockSpec((tile_b, fout_p), lambda i: (i, 0)),
        compiler_params=pltpu.CompilerParams(
            dimension_semantics=("parallel",)),
        cost_estimate=pl.CostEstimate(
            flops=int(flops), transcendentals=0,
            bytes_accessed=int(bytes_accessed)),
    )(*operands)

    return out_p[:B, :Fout]


def init_tide_encoder_params(key, in_features, hid_features, out_features,
                             num_blocks):
    """Deterministic synthetic params. Linear weights stored as (in, out)."""
    params = []
    fin = in_features
    for _ in range(num_blocks):
        key, k1, k2, k3 = jax.random.split(key, 4)
        w1 = jax.random.normal(k1, (fin, hid_features), jnp.float32) * (1.0 / (fin ** 0.5))
        b1 = jnp.zeros((hid_features,), jnp.float32)
        w2 = jax.random.normal(k2, (hid_features, out_features), jnp.float32) * (1.0 / (hid_features ** 0.5))
        b2 = jnp.zeros((out_features,), jnp.float32)
        has_shortcut = (fin != out_features)
        if has_shortcut:
            ws = jax.random.normal(k3, (fin, out_features), jnp.float32) * (1.0 / (fin ** 0.5))
            bs = jnp.zeros((out_features,), jnp.float32)
        else:
            ws = None
            bs = None
        gamma = jnp.ones((out_features,), jnp.float32)
        beta = jnp.zeros((out_features,), jnp.float32)
        params.append(dict(w1=w1, b1=b1, w2=w2, b2=b2, ws=ws, bs=bs,
                           gamma=gamma, beta=beta,
                           has_shortcut_linear=has_shortcut))
        fin = out_features
    return params


def _reference(x, params, layer_norm=True, eps=1e-5):
    """Plain-JAX reference mirroring the PyTorch eval() forward."""
    for p in params:
        residual = x
        h = jnp.maximum(x @ p["w1"] + p["b1"], 0.0)
        out = h @ p["w2"] + p["b2"]
        if p["has_shortcut_linear"]:
            sc = residual @ p["ws"] + p["bs"]
        else:
            sc = residual
        out = out + sc
        if layer_norm:
            mean = out.mean(-1, keepdims=True)
            var = ((out - mean) ** 2).mean(-1, keepdims=True)
            out = (out - mean) / jnp.sqrt(var + eps)
            out = out * p["gamma"] + p["beta"]
        x = out
    return x


if __name__ == "__main__":
    # x = concat(past+future projected covariates, past series, static covs)
    batch = 8
    in_features = 40      # e.g. proj(L+H) + L + static dims, flattened
    hid_features = 64
    out_features = 32
    num_blocks = 2        # block 0: Linear shortcut (40->32); block 1: identity

    key = jax.random.PRNGKey(0)
    kx, kp = jax.random.split(key)
    x = jax.random.normal(kx, (batch, in_features), jnp.float32)
    params = init_tide_encoder_params(kp, in_features, hid_features,
                                      out_features, num_blocks)

    y = tide_encoder(x, params)
    y = jax.block_until_ready(y)

    y_ref = _reference(x, params)
    assert y.shape == (batch, out_features)
    assert jnp.allclose(y, y_ref, atol=1e-4, rtol=1e-4), "mismatch vs reference"

    print("KERNEL_OK")
</pallas_src>

<mosaic_0001>
module attributes {stable_mosaic.version = 11 : i64} {
  func.func @_tide_encoder_kernel(%arg0: i32, %arg1: memref<8x128xf32, #tpu.memory_space<vmem>>, %arg2: memref<128x128xf32, #tpu.memory_space<vmem>>, %arg3: memref<1x128xf32, #tpu.memory_space<vmem>>, %arg4: memref<128x128xf32, #tpu.memory_space<vmem>>, %arg5: memref<1x128xf32, #tpu.memory_space<vmem>>, %arg6: memref<128x128xf32, #tpu.memory_space<vmem>>, %arg7: memref<1x128xf32, #tpu.memory_space<vmem>>, %arg8: memref<1x128xf32, #tpu.memory_space<vmem>>, %arg9: memref<1x128xf32, #tpu.memory_space<vmem>>, %arg10: memref<128x128xf32, #tpu.memory_space<vmem>>, %arg11: memref<1x128xf32, #tpu.memory_space<vmem>>, %arg12: memref<128x128xf32, #tpu.memory_space<vmem>>, %arg13: memref<1x128xf32, #tpu.memory_space<vmem>>, %arg14: memref<1x128xf32, #tpu.memory_space<vmem>>, %arg15: memref<1x128xf32, #tpu.memory_space<vmem>>, %arg16: memref<8x128xf32, #tpu.memory_space<vmem>>) attributes {dimension_semantics = [#tpu.dimension_semantics<parallel>], iteration_bounds = array<i64: 1>, scalar_prefetch = 0 : i64, scratch_operands = 0 : i64, tpu.core_type = #tpu.core_type<tc>, window_params = [{transform_indices = @transform_0, window_bounds = array<i64: 8, 128>}, {pipeline_mode = #tpu.pipeline_mode<synchronous>, transform_indices = @transform_1, window_bounds = array<i64: 128, 128>}, {pipeline_mode = #tpu.pipeline_mode<synchronous>, transform_indices = @transform_2, window_bounds = array<i64: 1, 128>}, {pipeline_mode = #tpu.pipeline_mode<synchronous>, transform_indices = @transform_3, window_bounds = array<i64: 128, 128>}, {pipeline_mode = #tpu.pipeline_mode<synchronous>, transform_indices = @transform_4, window_bounds = array<i64: 1, 128>}, {pipeline_mode = #tpu.pipeline_mode<synchronous>, transform_indices = @transform_5, window_bounds = array<i64: 128, 128>}, {pipeline_mode = #tpu.pipeline_mode<synchronous>, transform_indices = @transform_6, window_bounds = array<i64: 1, 128>}, {pipeline_mode = #tpu.pipeline_mode<synchronous>, transform_indices = @transform_7, window_bounds = array<i64: 1, 128>}, {pipeline_mode = #tpu.pipeline_mode<synchronous>, transform_indices = @transform_8, window_bounds = array<i64: 1, 128>}, {pipeline_mode = #tpu.pipeline_mode<synchronous>, transform_indices = @transform_9, window_bounds = array<i64: 128, 128>}, {pipeline_mode = #tpu.pipeline_mode<synchronous>, transform_indices = @transform_10, window_bounds = array<i64: 1, 128>}, {pipeline_mode = #tpu.pipeline_mode<synchronous>, transform_indices = @transform_11, window_bounds = array<i64: 128, 128>}, {pipeline_mode = #tpu.pipeline_mode<synchronous>, transform_indices = @transform_12, window_bounds = array<i64: 1, 128>}, {pipeline_mode = #tpu.pipeline_mode<synchronous>, transform_indices = @transform_13, window_bounds = array<i64: 1, 128>}, {pipeline_mode = #tpu.pipeline_mode<synchronous>, transform_indices = @transform_14, window_bounds = array<i64: 1, 128>}, {transform_indices = @transform_15, window_bounds = array<i64: 8, 128>}]} {
    %c0 = arith.constant 0 : index
    %c0_0 = arith.constant 0 : index
    %0 = vector.load %arg1[%c0, %c0_0] : memref<8x128xf32, #tpu.memory_space<vmem>>, vector<8x128xf32>
    %1 = tpu.iota {dimensions = array<i32: 1>} : vector<1x128xi32>
    %c32_i32 = arith.constant 32 : i32
    %2 = vector.broadcast %c32_i32 : i32 to vector<1x128xi32>
    %3 = arith.cmpi slt, %1, %2 : vector<1x128xi32>
    %c0_1 = arith.constant 0 : index
    %c0_2 = arith.constant 0 : index
    %4 = vector.load %arg2[%c0_1, %c0_2] : memref<128x128xf32, #tpu.memory_space<vmem>>, vector<128x128xf32>
    %cst = arith.constant dense<0.000000e+00> : vector<8x128xf32>
    %5 = tpu.matmul %0, %4, %cst {dimension_numbers = #tpu.dot_dimension_numbers<[1], [0], [0], [1], [0, 0, 1, 1], [], []>} : vector<8x128xf32>, vector<128x128xf32>, vector<8x128xf32> -> vector<8x128xf32>
    %c0_3 = arith.constant 0 : index
    %c0_4 = arith.constant 0 : index
    %6 = vector.load %arg3[%c0_3, %c0_4] : memref<1x128xf32, #tpu.memory_space<vmem>>, vector<1x128xf32>
    %7 = vector.broadcast %6 : vector<1x128xf32> to vector<8x128xf32>
    %8 = arith.addf %5, %7 : vector<8x128xf32>
    %cst_5 = arith.constant 0.000000e+00 : f32
    %9 = vector.broadcast %cst_5 : f32 to vector<8x128xf32>
    %10 = arith.maximumf %8, %9 : vector<8x128xf32>
    %c0_6 = arith.constant 0 : index
    %c0_7 = arith.constant 0 : index
    %11 = vector.load %arg4[%c0_6, %c0_7] : memref<128x128xf32, #tpu.memory_space<vmem>>, vector<128x128xf32>
    %cst_8 = arith.constant dense<0.000000e+00> : vector<8x128xf32>
    %12 = tpu.matmul %10, %11, %cst_8 {dimension_numbers = #tpu.dot_dimension_numbers<[1], [0], [0], [1], [0, 0, 1, 1], [], []>} : vector<8x128xf32>, vector<128x128xf32>, vector<8x128xf32> -> vector<8x128xf32>
    %c0_9 = arith.constant 0 : index
    %c0_10 = arith.constant 0 : index
    %13 = vector.load %arg5[%c0_9, %c0_10] : memref<1x128xf32, #tpu.memory_space<vmem>>, vector<1x128xf32>
    %14 = vector.broadcast %13 : vector<1x128xf32> to vector<8x128xf32>
    %15 = arith.addf %12, %14 : vector<8x128xf32>
    %c0_11 = arith.constant 0 : index
    %c0_12 = arith.constant 0 : index
    %16 = vector.load %arg6[%c0_11, %c0_12] : memref<128x128xf32, #tpu.memory_space<vmem>>, vector<128x128xf32>
    %cst_13 = arith.constant dense<0.000000e+00> : vector<8x128xf32>
    %17 = tpu.matmul %0, %16, %cst_13 {dimension_numbers = #tpu.dot_dimension_numbers<[1], [0], [0], [1], [0, 0, 1, 1], [], []>} : vector<8x128xf32>, vector<128x128xf32>, vector<8x128xf32> -> vector<8x128xf32>
    %c0_14 = arith.constant 0 : index
    %c0_15 = arith.constant 0 : index
    %18 = vector.load %arg7[%c0_14, %c0_15] : memref<1x128xf32, #tpu.memory_space<vmem>>, vector<1x128xf32>
    %19 = vector.broadcast %18 : vector<1x128xf32> to vector<8x128xf32>
    %20 = arith.addf %17, %19 : vector<8x128xf32>
    %21 = arith.addf %15, %20 : vector<8x128xf32>
    %cst_16 = arith.constant dense<0.000000e+00> : vector<8xf32>
    %22 = vector.multi_reduction <add>, %21, %cst_16 [1] : vector<8x128xf32> to vector<8xf32>
    %23 = vector.shape_cast %22 : vector<8xf32> to vector<8x1xf32>
    %cst_17 = arith.constant 3.125000e-02 : f32
    %24 = vector.broadcast %cst_17 : f32 to vector<8x1xf32>
    %25 = arith.mulf %23, %24 : vector<8x1xf32>
    %26 = vector.broadcast %25 : vector<8x1xf32> to vector<8x128xf32>
    %27 = arith.subf %21, %26 : vector<8x128xf32>
    %28 = arith.mulf %27, %27 : vector<8x128xf32>
    %cst_18 = arith.constant 0.000000e+00 : f32
    %29 = vector.shape_cast %3 : vector<1x128xi1> to vector<1x128xi1>
    %30 = vector.broadcast %29 : vector<1x128xi1> to vector<8x128xi1>
    %31 = vector.broadcast %cst_18 : f32 to vector<8x128xf32>
    %32 = arith.select %30, %28, %31 : vector<8x128xi1>, vector<8x128xf32>
    %cst_19 = arith.constant dense<0.000000e+00> : vector<8xf32>
    %33 = vector.multi_reduction <add>, %32, %cst_19 [1] : vector<8x128xf32> to vector<8xf32>
    %34 = vector.shape_cast %33 : vector<8xf32> to vector<8x1xf32>
    %cst_20 = arith.constant 3.125000e-02 : f32
    %35 = vector.broadcast %cst_20 : f32 to vector<8x1xf32>
    %36 = arith.mulf %34, %35 : vector<8x1xf32>
    %cst_21 = arith.constant 9.99999974E-6 : f32
    %37 = vector.broadcast %cst_21 : f32 to vector<8x1xf32>
    %38 = arith.addf %36, %37 : vector<8x1xf32>
    %39 = math.rsqrt %38 : vector<8x1xf32>
    %40 = vector.broadcast %39 : vector<8x1xf32> to vector<8x128xf32>
    %41 = arith.mulf %27, %40 : vector<8x128xf32>
    %c0_22 = arith.constant 0 : index
    %c0_23 = arith.constant 0 : index
    %42 = vector.load %arg8[%c0_22, %c0_23] : memref<1x128xf32, #tpu.memory_space<vmem>>, vector<1x128xf32>
    %43 = vector.broadcast %42 : vector<1x128xf32> to vector<8x128xf32>
    %44 = arith.mulf %41, %43 : vector<8x128xf32>
    %c0_24 = arith.constant 0 : index
    %c0_25 = arith.constant 0 : index
    %45 = vector.load %arg9[%c0_24, %c0_25] : memref<1x128xf32, #tpu.memory_space<vmem>>, vector<1x128xf32>
    %46 = vector.broadcast %45 : vector<1x128xf32> to vector<8x128xf32>
    %47 = arith.addf %44, %46 : vector<8x128xf32>
    %c0_26 = arith.constant 0 : index
    %c0_27 = arith.constant 0 : index
    %48 = vector.load %arg10[%c0_26, %c0_27] : memref<128x128xf32, #tpu.memory_space<vmem>>, vector<128x128xf32>
    %cst_28 = arith.constant dense<0.000000e+00> : vector<8x128xf32>
    %49 = tpu.matmul %47, %48, %cst_28 {dimension_numbers = #tpu.dot_dimension_numbers<[1], [0], [0], [1], [0, 0, 1, 1], [], []>} : vector<8x128xf32>, vector<128x128xf32>, vector<8x128xf32> -> vector<8x128xf32>
    %c0_29 = arith.constant 0 : index
    %c0_30 = arith.constant 0 : index
    %50 = vector.load %arg11[%c0_29, %c0_30] : memref<1x128xf32, #tpu.memory_space<vmem>>, vector<1x128xf32>
    %51 = vector.broadcast %50 : vector<1x128xf32> to vector<8x128xf32>
    %52 = arith.addf %49, %51 : vector<8x128xf32>
    %cst_31 = arith.constant 0.000000e+00 : f32
    %53 = vector.broadcast %cst_31 : f32 to vector<8x128xf32>
    %54 = arith.maximumf %52, %53 : vector<8x128xf32>
    %c0_32 = arith.constant 0 : index
    %c0_33 = arith.constant 0 : index
    %55 = vector.load %arg12[%c0_32, %c0_33] : memref<128x128xf32, #tpu.memory_space<vmem>>, vector<128x128xf32>
    %cst_34 = arith.constant dense<0.000000e+00> : vector<8x128xf32>
    %56 = tpu.matmul %54, %55, %cst_34 {dimension_numbers = #tpu.dot_dimension_numbers<[1], [0], [0], [1], [0, 0, 1, 1], [], []>} : vector<8x128xf32>, vector<128x128xf32>, vector<8x128xf32> -> vector<8x128xf32>
    %c0_35 = arith.constant 0 : index
    %c0_36 = arith.constant 0 : index
    %57 = vector.load %arg13[%c0_35, %c0_36] : memref<1x128xf32, #tpu.memory_space<vmem>>, vector<1x128xf32>
    %58 = vector.broadcast %57 : vector<1x128xf32> to vector<8x128xf32>
    %59 = arith.addf %56, %58 : vector<8x128xf32>
    %60 = arith.addf %59, %47 : vector<8x128xf32>
    %cst_37 = arith.constant dense<0.000000e+00> : vector<8xf32>
    %61 = vector.multi_reduction <add>, %60, %cst_37 [1] : vector<8x128xf32> to vector<8xf32>
    %62 = vector.shape_cast %61 : vector<8xf32> to vector<8x1xf32>
    %cst_38 = arith.constant 3.125000e-02 : f32
    %63 = vector.broadcast %cst_38 : f32 to vector<8x1xf32>
    %64 = arith.mulf %62, %63 : vector<8x1xf32>
    %65 = vector.broadcast %64 : vector<8x1xf32> to vector<8x128xf32>
    %66 = arith.subf %60, %65 : vector<8x128xf32>
    %67 = arith.mulf %66, %66 : vector<8x128xf32>
    %cst_39 = arith.constant 0.000000e+00 : f32
    %68 = vector.shape_cast %3 : vector<1x128xi1> to vector<1x128xi1>
    %69 = vector.broadcast %68 : vector<1x128xi1> to vector<8x128xi1>
    %70 = vector.broadcast %cst_39 : f32 to vector<8x128xf32>
    %71 = arith.select %69, %67, %70 : vector<8x128xi1>, vector<8x128xf32>
    %cst_40 = arith.constant dense<0.000000e+00> : vector<8xf32>
    %72 = vector.multi_reduction <add>, %71, %cst_40 [1] : vector<8x128xf32> to vector<8xf32>
    %73 = vector.shape_cast %72 : vector<8xf32> to vector<8x1xf32>
    %cst_41 = arith.constant 3.125000e-02 : f32
    %74 = vector.broadcast %cst_41 : f32 to vector<8x1xf32>
    %75 = arith.mulf %73, %74 : vector<8x1xf32>
    %cst_42 = arith.constant 9.99999974E-6 : f32
    %76 = vector.broadcast %cst_42 : f32 to vector<8x1xf32>
    %77 = arith.addf %75, %76 : vector<8x1xf32>
    %78 = math.rsqrt %77 : vector<8x1xf32>
    %79 = vector.broadcast %78 : vector<8x1xf32> to vector<8x128xf32>
    %80 = arith.mulf %66, %79 : vector<8x128xf32>
    %c0_43 = arith.constant 0 : index
    %c0_44 = arith.constant 0 : index
    %81 = vector.load %arg14[%c0_43, %c0_44] : memref<1x128xf32, #tpu.memory_space<vmem>>, vector<1x128xf32>
    %82 = vector.broadcast %81 : vector<1x128xf32> to vector<8x128xf32>
    %83 = arith.mulf %80, %82 : vector<8x128xf32>
    %c0_45 = arith.constant 0 : index
    %c0_46 = arith.constant 0 : index
    %84 = vector.load %arg15[%c0_45, %c0_46] : memref<1x128xf32, #tpu.memory_space<vmem>>, vector<1x128xf32>
    %85 = vector.broadcast %84 : vector<1x128xf32> to vector<8x128xf32>
    %86 = arith.addf %83, %85 : vector<8x128xf32>
    %c0_47 = arith.constant 0 : index
    %c0_48 = arith.constant 0 : index
    %87 = vector.load %arg16[%c0_47, %c0_48] : memref<8x128xf32, #tpu.memory_space<vmem>>, vector<8x128xf32>
    tpu.vector_store %arg16[%c0_47, %c0_48], %86 {strides = array<i32>} : memref<8x128xf32, #tpu.memory_space<vmem>>, vector<8x128xf32>,
    return
  }
  func.func @transform_0(%arg0: i32) -> (i32, i32) {
    %c0_i32 = arith.constant 0 : i32
    %c0_i32_0 = arith.constant 0 : i32
    return %arg0, %c0_i32 : i32, i32
  }
  func.func @transform_1(%arg0: i32) -> (i32, i32) {
    %c0_i32 = arith.constant 0 : i32
    %c0_i32_0 = arith.constant 0 : i32
    %c0_i32_1 = arith.constant 0 : i32
    return %c0_i32, %c0_i32_0 : i32, i32
  }
  func.func @transform_2(%arg0: i32) -> (i32, i32) {
    %c0_i32 = arith.constant 0 : i32
    %c0_i32_0 = arith.constant 0 : i32
    %c0_i32_1 = arith.constant 0 : i32
    return %c0_i32, %c0_i32_0 : i32, i32
  }
  func.func @transform_3(%arg0: i32) -> (i32, i32) {
    %c0_i32 = arith.constant 0 : i32
    %c0_i32_0 = arith.constant 0 : i32
    %c0_i32_1 = arith.constant 0 : i32
    return %c0_i32, %c0_i32_0 : i32, i32
  }
  func.func @transform_4(%arg0: i32) -> (i32, i32) {
    %c0_i32 = arith.constant 0 : i32
    %c0_i32_0 = arith.constant 0 : i32
    %c0_i32_1 = arith.constant 0 : i32
    return %c0_i32, %c0_i32_0 : i32, i32
  }
  func.func @transform_5(%arg0: i32) -> (i32, i32) {
    %c0_i32 = arith.constant 0 : i32
    %c0_i32_0 = arith.constant 0 : i32
    %c0_i32_1 = arith.constant 0 : i32
    return %c0_i32, %c0_i32_0 : i32, i32
  }
  func.func @transform_6(%arg0: i32) -> (i32, i32) {
    %c0_i32 = arith.constant 0 : i32
    %c0_i32_0 = arith.constant 0 : i32
    %c0_i32_1 = arith.constant 0 : i32
    return %c0_i32, %c0_i32_0 : i32, i32
  }
  func.func @transform_7(%arg0: i32) -> (i32, i32) {
    %c0_i32 = arith.constant 0 : i32
    %c0_i32_0 = arith.constant 0 : i32
    %c0_i32_1 = arith.constant 0 : i32
    return %c0_i32, %c0_i32_0 : i32, i32
  }
  func.func @transform_8(%arg0: i32) -> (i32, i32) {
    %c0_i32 = arith.constant 0 : i32
    %c0_i32_0 = arith.constant 0 : i32
    %c0_i32_1 = arith.constant 0 : i32
    return %c0_i32, %c0_i32_0 : i32, i32
  }
  func.func @transform_9(%arg0: i32) -> (i32, i32) {
    %c0_i32 = arith.constant 0 : i32
    %c0_i32_0 = arith.constant 0 : i32
    %c0_i32_1 = arith.constant 0 : i32
    return %c0_i32, %c0_i32_0 : i32, i32
  }
  func.func @transform_10(%arg0: i32) -> (i32, i32) {
    %c0_i32 = arith.constant 0 : i32
    %c0_i32_0 = arith.constant 0 : i32
    %c0_i32_1 = arith.constant 0 : i32
    return %c0_i32, %c0_i32_0 : i32, i32
  }
  func.func @transform_11(%arg0: i32) -> (i32, i32) {
    %c0_i32 = arith.constant 0 : i32
    %c0_i32_0 = arith.constant 0 : i32
    %c0_i32_1 = arith.constant 0 : i32
    return %c0_i32, %c0_i32_0 : i32, i32
  }
  func.func @transform_12(%arg0: i32) -> (i32, i32) {
    %c0_i32 = arith.constant 0 : i32
    %c0_i32_0 = arith.constant 0 : i32
    %c0_i32_1 = arith.constant 0 : i32
    return %c0_i32, %c0_i32_0 : i32, i32
  }
  func.func @transform_13(%arg0: i32) -> (i32, i32) {
    %c0_i32 = arith.constant 0 : i32
    %c0_i32_0 = arith.constant 0 : i32
    %c0_i32_1 = arith.constant 0 : i32
    return %c0_i32, %c0_i32_0 : i32, i32
  }
  func.func @transform_14(%arg0: i32) -> (i32, i32) {
    %c0_i32 = arith.constant 0 : i32
    %c0_i32_0 = arith.constant 0 : i32
    %c0_i32_1 = arith.constant 0 : i32
    return %c0_i32, %c0_i32_0 : i32, i32
  }
  func.func @transform_15(%arg0: i32) -> (i32, i32) {
    %c0_i32 = arith.constant 0 : i32
    %c0_i32_0 = arith.constant 0 : i32
    return %arg0, %c0_i32 : i32, i32
  }
}

</mosaic_0001>

<llo_original>
// kernel: tpu_custom_call.1
$region0: #{tpu_custom_call.1}
  #allocation0 [shape = 'u32[]', space=smem, size = 0x4, offset = 0x4, fixed_abs, tag = 'smem constant byte address 0x4 - core index']
  #allocation1 [shape = 'u32[144,128]{1,0:T(1,128)}', space=vmem, size = 0x12000, scoped, tag = 'internal scratch']
  %s0 = inlined_call_operand.hbm [shape: f32[8,128], index: 0, kind: input, shape index: {}]
  %s1 = inlined_call_operand.hbm [shape: f32[128,128], index: 1, kind: input, shape index: {}]
  %s2 = inlined_call_operand.vmem [shape: f32[1,128], index: 2, kind: input, shape index: {}]
  %s3 = inlined_call_operand.hbm [shape: f32[128,128], index: 3, kind: input, shape index: {}]
  %s4 = inlined_call_operand.vmem [shape: f32[1,128], index: 4, kind: input, shape index: {}]
  %s5 = inlined_call_operand.hbm [shape: f32[128,128], index: 5, kind: input, shape index: {}]
  %s6 = inlined_call_operand.vmem [shape: f32[1,128], index: 6, kind: input, shape index: {}]
  %s7 = inlined_call_operand.vmem [shape: f32[1,128], index: 7, kind: input, shape index: {}]
  %s8 = inlined_call_operand.vmem [shape: f32[1,128], index: 8, kind: input, shape index: {}]
  %s9 = inlined_call_operand.hbm [shape: f32[128,128], index: 9, kind: input, shape index: {}]
  %s10 = inlined_call_operand.vmem [shape: f32[1,128], index: 10, kind: input, shape index: {}]
  %s11 = inlined_call_operand.hbm [shape: f32[128,128], index: 11, kind: input, shape index: {}]
  %s12 = inlined_call_operand.vmem [shape: f32[1,128], index: 12, kind: input, shape index: {}]
  %s13 = inlined_call_operand.vmem [shape: f32[1,128], index: 13, kind: input, shape index: {}]
  %s14 = inlined_call_operand.vmem [shape: f32[1,128], index: 14, kind: input, shape index: {}]
  %s15 = inlined_call_operand.hbm [shape: f32[8,128], index: 15, kind: output, shape index: {}]
  %s16 = sld [smem:[#allocation0]]
  $region94: #{tpu_custom_call.1} parent=0
    _
  %s18 = ssub.s32 1, %s16
  %s19 = scalar_select 0, %s18, %s16
  $region1: #{tpu_custom_call.1} parent=0
    #allocation2 [shape = 'u8[4096]{0}', space=vmem, size = 0x1000, scoped, tag = 'input window, operand 0, single buffered']
    #allocation3 [shape = 's32[1]{0}', space=sflag, size = 0x4, scoped, tag = 'scoped memory for tpu_custom_call.1']
    #allocation4 [shape = 's32[1]{0}', space=sflag, size = 0x4, scoped, tag = 'scoped memory for tpu_custom_call.1']
    #allocation5 [shape = 'u8[65536]{0}', space=vmem, size = 0x10000, scoped, tag = 'input window, operand 1, single buffered']
    #allocation6 [shape = 's32[1]{0}', space=sflag, size = 0x4, scoped, tag = 'scoped memory for tpu_custom_call.1']
    #allocation7 [shape = 'u8[65536]{0}', space=vmem, size = 0x10000, scoped, tag = 'input window, operand 3, single buffered']
    #allocation8 [shape = 'u8[65536]{0}', space=vmem, size = 0x10000, scoped, tag = 'input window, operand 5, single buffered']
    #allocation9 [shape = 's32[1]{0}', space=sflag, size = 0x4, scoped, tag = 'scoped memory for tpu_custom_call.1']
    #allocation10 [shape = 'u8[65536]{0}', space=vmem, size = 0x10000, scoped, tag = 'input window, operand 9, single buffered']
    #allocation11 [shape = 'u8[65536]{0}', space=vmem, size = 0x10000, scoped, tag = 'input window, operand 11, single buffered']
    #allocation12 [shape = 's32[1]{0}', space=sflag, size = 0x4, scoped, tag = 'scoped memory for tpu_custom_call.1']
    #allocation13 [shape = 'u8[4096]{0}', space=vmem, size = 0x1000, scoped, tag = 'output window, operand 0, single buffered']
    %20 = vsyncpa [#allocation3], 0
    %21 = vsyncpa [#allocation6], 0
    %22 = vsyncpa [#allocation9], 0
    %23 = vsyncpa [#allocation12], 0
    %24 = vsyncpa [#allocation4], 0
    // Predicated region
    $region2: #{tpu_custom_call.1} parent=1 // pred_check
      _
    $region3: #{tpu_custom_call.1} parent=1 // pred_check_branch
      %26 = sbr.rel (0) target = $region5
    $region4: #{tpu_custom_call.1} parent=1 // pred_region
      %s28 = ssub.s32 128, 128
      %29 = vsyncadd [#allocation3], %s28
      %s31 = sshll.u32 [#allocation2], 4
      %s32 = int_to_ptr.vmem [resolvable:$true] %s31
      %34 = dma.hbm_to_vmem [thread:$0]  %s0, 128, %s32, [#allocation3]
    $region5: #{tpu_custom_call.1} parent=1 // pred_fallthru
      _
    // Predicated region
    $region6: #{tpu_custom_call.1} parent=1 // pred_check
      _
    $region7: #{tpu_custom_call.1} parent=1 // pred_check_branch
      %36 = sbr.rel (0) target = $region9
    $region8: #{tpu_custom_call.1} parent=1 // pred_region
      %s38 = ssub.s32 2048, 2048
      %39 = vsyncadd [#allocation6], %s38
      %s40 = sshll.u32 [#allocation5], 4
      %s41 = int_to_ptr.vmem [resolvable:$true] %s40
      %46 = dma.hbm_to_vmem [thread:$0]  %s1, 2048, %s41, [#allocation6], 128, 128, 8
    $region9: #{tpu_custom_call.1} parent=1 // pred_fallthru
      _
    // Predicated region
    $region10: #{tpu_custom_call.1} parent=1 // pred_check
      _
    $region11: #{tpu_custom_call.1} parent=1 // pred_check_branch
      %48 = sbr.rel (0) target = $region13
    $region12: #{tpu_custom_call.1} parent=1 // pred_region
      _
    $region13: #{tpu_custom_call.1} parent=1 // pred_fallthru
      _
    // Predicated region
    $region14: #{tpu_custom_call.1} parent=1 // pred_check
      _
    $region15: #{tpu_custom_call.1} parent=1 // pred_check_branch
      %50 = sbr.rel (0) target = $region17
    $region16: #{tpu_custom_call.1} parent=1 // pred_region
      %s52 = ssub.s32 2048, 2048
      %53 = vsyncadd [#allocation6], %s52
      %s54 = sshll.u32 [#allocation7], 4
      %s55 = int_to_ptr.vmem [resolvable:$true] %s54
      %60 = dma.hbm_to_vmem [thread:$0]  %s3, 2048, %s55, [#allocation6], 128, 128, 8
    $region17: #{tpu_custom_call.1} parent=1 // pred_fallthru
      _
    // Predicated region
    $region18: #{tpu_custom_call.1} parent=1 // pred_check
      _
    $region19: #{tpu_custom_call.1} parent=1 // pred_check_branch
      %62 = sbr.rel (0) target = $region21
    $region20: #{tpu_custom_call.1} parent=1 // pred_region
      _
    $region21: #{tpu_custom_call.1} parent=1 // pred_fallthru
      _
    // Predicated region
    $region22: #{tpu_custom_call.1} parent=1 // pred_check
      _
    $region23: #{tpu_custom_call.1} parent=1 // pred_check_branch
      %64 = sbr.rel (0) target = $region25
    $region24: #{tpu_custom_call.1} parent=1 // pred_region
      %s66 = ssub.s32 2048, 2048
      %67 = vsyncadd [#allocation9], %s66
      %s68 = sshll.u32 [#allocation8], 4
      %s69 = int_to_ptr.vmem [resolvable:$true] %s68
      %74 = dma.hbm_to_vmem [thread:$0]  %s5, 2048, %s69, [#allocation9], 128, 128, 8
    $region25: #{tpu_custom_call.1} parent=1 // pred_fallthru
      _
    // Predicated region
    $region26: #{tpu_custom_call.1} parent=1 // pred_check
      _
    $region27: #{tpu_custom_call.1} parent=1 // pred_check_branch
      %76 = sbr.rel (0) target = $region29
    $region28: #{tpu_custom_call.1} parent=1 // pred_region
      _
    $region29: #{tpu_custom_call.1} parent=1 // pred_fallthru
      _
    // Predicated region
    $region30: #{tpu_custom_call.1} parent=1 // pred_check
      _
    $region31: #{tpu_custom_call.1} parent=1 // pred_check_branch
      %78 = sbr.rel (0) target = $region33
    $region32: #{tpu_custom_call.1} parent=1 // pred_region
      _
    $region33: #{tpu_custom_call.1} parent=1 // pred_fallthru
      _
    // Predicated region
    $region34: #{tpu_custom_call.1} parent=1 // pred_check
      _
    $region35: #{tpu_custom_call.1} parent=1 // pred_check_branch
      %80 = sbr.rel (0) target = $region37
    $region36: #{tpu_custom_call.1} parent=1 // pred_region
      _
    $region37: #{tpu_custom_call.1} parent=1 // pred_fallthru
      _
    // Predicated region
    $region38: #{tpu_custom_call.1} parent=1 // pred_check
      _
    $region39: #{tpu_custom_call.1} parent=1 // pred_check_branch
      %82 = sbr.rel (0) target = $region41
    $region40: #{tpu_custom_call.1} parent=1 // pred_region
      %s84 = ssub.s32 2048, 2048
      %85 = vsyncadd [#allocation9], %s84
      %s86 = sshll.u32 [#allocation10], 4
      %s87 = int_to_ptr.vmem [resolvable:$true] %s86
      %92 = dma.hbm_to_vmem [thread:$0]  %s9, 2048, %s87, [#allocation9], 128, 128, 8
    $region41: #{tpu_custom_call.1} parent=1 // pred_fallthru
      _
    // Predicated region
    $region42: #{tpu_custom_call.1} parent=1 // pred_check
      _
    $region43: #{tpu_custom_call.1} parent=1 // pred_check_branch
      %94 = sbr.rel (0) target = $region45
    $region44: #{tpu_custom_call.1} parent=1 // pred_region
      _
    $region45: #{tpu_custom_call.1} parent=1 // pred_fallthru
      _
    // Predicated region
    $region46: #{tpu_custom_call.1} parent=1 // pred_check
      _
    $region47: #{tpu_custom_call.1} parent=1 // pred_check_branch
      %96 = sbr.rel (0) target = $region49
    $region48: #{tpu_custom_call.1} parent=1 // pred_region
      %s98 = ssub.s32 2048, 2048
      %99 = vsyncadd [#allocation12], %s98
      %s100 = sshll.u32 [#allocation11], 4
      %s101 = int_to_ptr.vmem [resolvable:$true] %s100
      %106 = dma.hbm_to_vmem [thread:$0]  %s11, 2048, %s101, [#allocation12], 128, 128, 8
    $region49: #{tpu_custom_call.1} parent=1 // pred_fallthru
      _
    // Predicated region
    $region50: #{tpu_custom_call.1} parent=1 // pred_check
      _
    $region51: #{tpu_custom_call.1} parent=1 // pred_check_branch
      %108 = sbr.rel (0) target = $region53
    $region52: #{tpu_custom_call.1} parent=1 // pred_region
      _
    $region53: #{tpu_custom_call.1} parent=1 // pred_fallthru
      _
    // Predicated region
    $region54: #{tpu_custom_call.1} parent=1 // pred_check
      _
    $region55: #{tpu_custom_call.1} parent=1 // pred_check_branch
      %110 = sbr.rel (0) target = $region57
    $region56: #{tpu_custom_call.1} parent=1 // pred_region
      _
    $region57: #{tpu_custom_call.1} parent=1 // pred_fallthru
      _
    // Predicated region
    $region58: #{tpu_custom_call.1} parent=1 // pred_check
      _
    $region59: #{tpu_custom_call.1} parent=1 // pred_check_branch
      %112 = sbr.rel (0) target = $region61
    $region60: #{tpu_custom_call.1} parent=1 // pred_region
      _
    $region61: #{tpu_custom_call.1} parent=1 // pred_fallthru
      _
    // Predicated region
    $region62: #{tpu_custom_call.1} parent=1 // pred_check
      _
    $region63: #{tpu_custom_call.1} parent=1 // pred_check_branch
      %114 = sbr.rel (0) target = $region65
    $region64: #{tpu_custom_call.1} parent=1 // pred_region
      %115 = dma.done [#allocation3], 128
    $region65: #{tpu_custom_call.1} parent=1 // pred_fallthru
      _
    // Predicated region
    $region66: #{tpu_custom_call.1} parent=1 // pred_check
      _
    $region67: #{tpu_custom_call.1} parent=1 // pred_check_branch
      %117 = sbr.rel (0) target = $region69
    $region68: #{tpu_custom_call.1} parent=1 // pred_region
      %118 = dma.done [#allocation6], 2048
    $region69: #{tpu_custom_call.1} parent=1 // pred_fallthru
      _
    // Predicated region
    $region70: #{tpu_custom_call.1} parent=1 // pred_check
      _
    $region71: #{tpu_custom_call.1} parent=1 // pred_check_branch
      %120 = sbr.rel (0) target = $region73
    $region72: #{tpu_custom_call.1} parent=1 // pred_region
      %121 = dma.done [#allocation6], 2048
    $region73: #{tpu_custom_call.1} parent=1 // pred_fallthru
      _
    // Predicated region
    $region74: #{tpu_custom_call.1} parent=1 // pred_check
      _
    $region75: #{tpu_custom_call.1} parent=1 // pred_check_branch
      %123 = sbr.rel (0) target = $region77
    $region76: #{tpu_custom_call.1} parent=1 // pred_region
      %124 = dma.done [#allocation9], 2048
    $region77: #{tpu_custom_call.1} parent=1 // pred_fallthru
      _
    // Predicated region
    $region78: #{tpu_custom_call.1} parent=1 // pred_check
      _
    $region79: #{tpu_custom_call.1} parent=1 // pred_check_branch
      %126 = sbr.rel (0) target = $region81
    $region80: #{tpu_custom_call.1} parent=1 // pred_region
      %127 = dma.done [#allocation9], 2048
    $region81: #{tpu_custom_call.1} parent=1 // pred_fallthru
      _
    // Predicated region
    $region82: #{tpu_custom_call.1} parent=1 // pred_check
      _
    $region83: #{tpu_custom_call.1} parent=1 // pred_check_branch
      %129 = sbr.rel (0) target = $region85
    $region84: #{tpu_custom_call.1} parent=1 // pred_region
      %130 = dma.done [#allocation12], 2048
    $region85: #{tpu_custom_call.1} parent=1 // pred_fallthru
      _
    %v131 = vld [vmem:[#allocation2] sm:$0xff]
    %v132 = vlaneseq
    %v133 = vand.u32 %v132, 127
    %vm134 = vcmp.lt.s32.totalorder %v133, 32
    %v135 = vld [vmem:[#allocation5] sm:$0xff]
    %v136 = vld [vmem:[#allocation5 + $0x8] sm:$0xff]
    %v137 = vld [vmem:[#allocation5 + $0x10] sm:$0xff]
    %v138 = vld [vmem:[#allocation5 + $0x18] sm:$0xff]
    %v139 = vld [vmem:[#allocation5 + $0x20] sm:$0xff]
    %v140 = vld [vmem:[#allocation5 + $0x28] sm:$0xff]
    %v141 = vld [vmem:[#allocation5 + $0x30] sm:$0xff]
    %v142 = vld [vmem:[#allocation5 + $0x38] sm:$0xff]
    %v143 = vld [vmem:[#allocation5 + $0x40] sm:$0xff]
    %v144 = vld [vmem:[#allocation5 + $0x48] sm:$0xff]
    %v145 = vld [vmem:[#allocation5 + $0x50] sm:$0xff]
    %v146 = vld [vmem:[#allocation5 + $0x58] sm:$0xff]
    %v147 = vld [vmem:[#allocation5 + $0x60] sm:$0xff]
    %v148 = vld [vmem:[#allocation5 + $0x68] sm:$0xff]
    %v149 = vld [vmem:[#allocation5 + $0x70] sm:$0xff]
    %v150 = vld [vmem:[#allocation5 + $0x78] sm:$0xff]
    %v151 = vld [vmem:[%s2] sm:$0x1]
    %v153 = vlaneseq
    %v154 = vshrl.u32 %v153, 7
    %v155 = vsub.s32 0, %v154
    %v156 = vrot.slane %v151, %v155
    %158 = vmatprep.subr.mxu0 0.0
    %159 = vmatpush1.msra.mxu0 %v150
    %160 = vmatprep.subr.mxu0 0.0
    %161 = vmatpush1.msra.mxu0 %v149
    %162 = vmatprep.subr.mxu0 0.0
    %163 = vmatpush1.msra.mxu0 %v148
    %164 = vmatprep.subr.mxu0 0.0
    %165 = vmatpush1.msra.mxu0 %v147
    %166 = vmatprep.subr.mxu0 0.0
    %167 = vmatpush1.msra.mxu0 %v146
    %168 = vmatprep.subr.mxu0 0.0
    %169 = vmatpush1.msra.mxu0 %v145
    %170 = vmatprep.subr.mxu0 0.0
    %171 = vmatpush1.msra.mxu0 %v144
    %172 = vmatprep.subr.mxu0 0.0
    %173 = vmatpush1.msra.mxu0 %v143
    %174 = vmatprep.subr.mxu0 0.0
    %175 = vmatpush1.msra.mxu0 %v142
    %176 = vmatprep.subr.mxu0 0.0
    %177 = vmatpush1.msra.mxu0 %v141
    %178 = vmatprep.subr.mxu0 0.0
    %179 = vmatpush1.msra.mxu0 %v140
    %180 = vmatprep.subr.mxu0 0.0
    %181 = vmatpush1.msra.mxu0 %v139
    %182 = vmatprep.subr.mxu0 0.0
    %183 = vmatpush1.msra.mxu0 %v138
    %184 = vmatprep.subr.mxu0 0.0
    %185 = vmatpush1.msra.mxu0 %v137
    %186 = vmatprep.subr.mxu0 0.0
    %187 = vmatpush1.msra.mxu0 %v136
    %188 = vmatprep.subr.mxu0 0.0
    %189 = vmatpush1.msra.mxu0 %v135
    %190 = vmatprep.subr.mxu0 0.0
    %191 = vmatpush2.msra.mxu0 0.0
    %192 = vmatprep.subr.mxu0 0.0
    %193 = vmatpush2.msra.mxu0 0.0
    %194 = vmatprep.subr.mxu0 0.0
    %195 = vmatpush2.msra.mxu0 0.0
    %196 = vmatprep.subr.mxu0 0.0
    %197 = vmatpush2.msra.mxu0 0.0
    %198 = vmatprep.subr.mxu0 0.0
    %199 = vmatpush2.msra.mxu0 0.0
    %200 = vmatprep.subr.mxu0 0.0
    %201 = vmatpush2.msra.mxu0 0.0
    %202 = vmatprep.subr.mxu0 0.0
    %203 = vmatpush2.msra.mxu0 0.0
    %204 = vmatprep.subr.mxu0 0.0
    %205 = vmatpush2.msra.mxu0 0.0
    %206 = vmatprep.subr.mxu0 0.0
    %207 = vmatpush2.msra.mxu0 0.0
    %208 = vmatprep.subr.mxu0 0.0
    %209 = vmatpush2.msra.mxu0 0.0
    %210 = vmatprep.subr.mxu0 0.0
    %211 = vmatpush2.msra.mxu0 0.0
    %212 = vmatprep.subr.mxu0 0.0
    %213 = vmatpush2.msra.mxu0 0.0
    %214 = vmatprep.subr.mxu0 0.0
    %215 = vmatpush2.msra.mxu0 0.0
    %216 = vmatprep.subr.mxu0 0.0
    %217 = vmatpush2.msra.mxu0 0.0
    %218 = vmatprep.subr.mxu0 0.0
    %219 = vmatpush2.msra.mxu0 0.0
    %220 = vmatprep.subr.mxu0 0.0
    %221 = vmatpush2.msra.mxu0 0.0
    %222 = vmatprep.mubr.f32.mxu0 0.0
    %223 = vmatmul.mubr.f32.gmra.mxu0 %v131
    %v224 = vpop.f32.mrf.mxu0
    %v225 = vadd.f32 %v156, %v224
    %v226 = vpop.f32.mrf.mxu0
    %227 = vdwg.mxu0
    %v228 = vmax.f32 %v225, 0.0
    %v229 = vld [vmem:[#allocation7] sm:$0xff]
    %v230 = vld [vmem:[#allocation7 + $0x8] sm:$0xff]
    %v231 = vld [vmem:[#allocation7 + $0x10] sm:$0xff]
    %v232 = vld [vmem:[#allocation7 + $0x18] sm:$0xff]
    %v233 = vld [vmem:[#allocation7 + $0x20] sm:$0xff]
    %v234 = vld [vmem:[#allocation7 + $0x28] sm:$0xff]
    %v235 = vld [vmem:[#allocation7 + $0x30] sm:$0xff]
    %v236 = vld [vmem:[#allocation7 + $0x38] sm:$0xff]
    %v237 = vld [vmem:[#allocation7 + $0x40] sm:$0xff]
    %v238 = vld [vmem:[#allocation7 + $0x48] sm:$0xff]
    %v239 = vld [vmem:[#allocation7 + $0x50] sm:$0xff]
    %v240 = vld [vmem:[#allocation7 + $0x58] sm:$0xff]
    %v241 = vld [vmem:[#allocation7 + $0x60] sm:$0xff]
    %v242 = vld [vmem:[#allocation7 + $0x68] sm:$0xff]
    %v243 = vld [vmem:[#allocation7 + $0x70] sm:$0xff]
    %v244 = vld [vmem:[#allocation7 + $0x78] sm:$0xff]
    %v245 = vld [vmem:[%s4] sm:$0x1]
    %v247 = vlaneseq
    %v248 = vshrl.u32 %v247, 7
    %v249 = vsub.s32 0, %v248
    %v250 = vrot.slane %v245, %v249
    %252 = vmatprep.subr.mxu0 0.0
    %253 = vmatpush1.msra.mxu0 %v244
    %254 = vmatprep.subr.mxu0 0.0
    %255 = vmatpush1.msra.mxu0 %v243
    %256 = vmatprep.subr.mxu0 0.0
    %257 = vmatpush1.msra.mxu0 %v242
    %258 = vmatprep.subr.mxu0 0.0
    %259 = vmatpush1.msra.mxu0 %v241
    %260 = vmatprep.subr.mxu0 0.0
    %261 = vmatpush1.msra.mxu0 %v240
    %262 = vmatprep.subr.mxu0 0.0
    %263 = vmatpush1.msra.mxu0 %v239
    %264 = vmatprep.subr.mxu0 0.0
    %265 = vmatpush1.msra.mxu0 %v238
    %266 = vmatprep.subr.mxu0 0.0
    %267 = vmatpush1.msra.mxu0 %v237
    %268 = vmatprep.subr.mxu0 0.0
    %269 = vmatpush1.msra.mxu0 %v236
    %270 = vmatprep.subr.mxu0 0.0
    %271 = vmatpush1.msra.mxu0 %v235
    %272 = vmatprep.subr.mxu0 0.0
    %273 = vmatpush1.msra.mxu0 %v234
    %274 = vmatprep.subr.mxu0 0.0
    %275 = vmatpush1.msra.mxu0 %v233
    %276 = vmatprep.subr.mxu0 0.0
    %277 = vmatpush1.msra.mxu0 %v232
    %278 = vmatprep.subr.mxu0 0.0
    %279 = vmatpush1.msra.mxu0 %v231
    %280 = vmatprep.subr.mxu0 0.0
    %281 = vmatpush1.msra.mxu0 %v230
    %282 = vmatprep.subr.mxu0 0.0
    %283 = vmatpush1.msra.mxu0 %v229
    %284 = vmatprep.subr.mxu0 0.0
    %285 = vmatpush2.msra.mxu0 0.0
    %286 = vmatprep.subr.mxu0 0.0
    %287 = vmatpush2.msra.mxu0 0.0
    %288 = vmatprep.subr.mxu0 0.0
    %289 = vmatpush2.msra.mxu0 0.0
    %290 = vmatprep.subr.mxu0 0.0
    %291 = vmatpush2.msra.mxu0 0.0
    %292 = vmatprep.subr.mxu0 0.0
    %293 = vmatpush2.msra.mxu0 0.0
    %294 = vmatprep.subr.mxu0 0.0
    %295 = vmatpush2.msra.mxu0 0.0
    %296 = vmatprep.subr.mxu0 0.0
    %297 = vmatpush2.msra.mxu0 0.0
    %298 = vmatprep.subr.mxu0 0.0
    %299 = vmatpush2.msra.mxu0 0.0
    %300 = vmatprep.subr.mxu0 0.0
    %301 = vmatpush2.msra.mxu0 0.0
    %302 = vmatprep.subr.mxu0 0.0
    %303 = vmatpush2.msra.mxu0 0.0
    %304 = vmatprep.subr.mxu0 0.0
    %305 = vmatpush2.msra.mxu0 0.0
    %306 = vmatprep.subr.mxu0 0.0
    %307 = vmatpush2.msra.mxu0 0.0
    %308 = vmatprep.subr.mxu0 0.0
    %309 = vmatpush2.msra.mxu0 0.0
    %310 = vmatprep.subr.mxu0 0.0
    %311 = vmatpush2.msra.mxu0 0.0
    %312 = vmatprep.subr.mxu0 0.0
    %313 = vmatpush2.msra.mxu0 0.0
    %314 = vmatprep.subr.mxu0 0.0
    %315 = vmatpush2.msra.mxu0 0.0
    %316 = vmatprep.mubr.f32.mxu0 0.0
    %317 = vmatmul.mubr.f32.gmra.mxu0 %v228
    %v318 = vpop.f32.mrf.mxu0
    %v319 = vadd.f32 %v250, %v318
    %v320 = vpop.f32.mrf.mxu0
    %321 = vdwg.mxu0
    %v322 = vld [vmem:[#allocation8] sm:$0xff]
    %v323 = vld [vmem:[#allocation8 + $0x8] sm:$0xff]
    %v324 = vld [vmem:[#allocation8 + $0x10] sm:$0xff]
    %v325 = vld [vmem:[#allocation8 + $0x18] sm:$0xff]
    %v326 = vld [vmem:[#allocation8 + $0x20] sm:$0xff]
    %v327 = vld [vmem:[#allocation8 + $0x28] sm:$0xff]
    %v328 = vld [vmem:[#allocation8 + $0x30] sm:$0xff]
    %v329 = vld [vmem:[#allocation8 + $0x38] sm:$0xff]
    %v330 = vld [vmem:[#allocation8 + $0x40] sm:$0xff]
    %v331 = vld [vmem:[#allocation8 + $0x48] sm:$0xff]
    %v332 = vld [vmem:[#allocation8 + $0x50] sm:$0xff]
    %v333 = vld [vmem:[#allocation8 + $0x58] sm:$0xff]
    %v334 = vld [vmem:[#allocation8 + $0x60] sm:$0xff]
    %v335 = vld [vmem:[#allocation8 + $0x68] sm:$0xff]
    %v336 = vld [vmem:[#allocation8 + $0x70] sm:$0xff]
    %v337 = vld [vmem:[#allocation8 + $0x78] sm:$0xff]
    %v338 = vld [vmem:[%s6] sm:$0x1]
    %v340 = vlaneseq
    %v341 = vshrl.u32 %v340, 7
    %v342 = vsub.s32 0, %v341
    %v343 = vrot.slane %v338, %v342
    %345 = vmatprep.subr.mxu0 0.0
    %346 = vmatpush1.msra.mxu0 %v337
    %347 = vmatprep.subr.mxu0 0.0
    %348 = vmatpush1.msra.mxu0 %v336
    %349 = vmatprep.subr.mxu0 0.0
    %350 = vmatpush1.msra.mxu0 %v335
    %351 = vmatprep.subr.mxu0 0.0
    %352 = vmatpush1.msra.mxu0 %v334
    %353 = vmatprep.subr.mxu0 0.0
    %354 = vmatpush1.msra.mxu0 %v333
    %355 = vmatprep.subr.mxu0 0.0
    %356 = vmatpush1.msra.mxu0 %v332
    %357 = vmatprep.subr.mxu0 0.0
    %358 = vmatpush1.msra.mxu0 %v331
    %359 = vmatprep.subr.mxu0 0.0
    %360 = vmatpush1.msra.mxu0 %v330
    %361 = vmatprep.subr.mxu0 0.0
    %362 = vmatpush1.msra.mxu0 %v329
    %363 = vmatprep.subr.mxu0 0.0
    %364 = vmatpush1.msra.mxu0 %v328
    %365 = vmatprep.subr.mxu0 0.0
    %366 = vmatpush1.msra.mxu0 %v327
    %367 = vmatprep.subr.mxu0 0.0
    %368 = vmatpush1.msra.mxu0 %v326
    %369 = vmatprep.subr.mxu0 0.0
    %370 = vmatpush1.msra.mxu0 %v325
    %371 = vmatprep.subr.mxu0 0.0
    %372 = vmatpush1.msra.mxu0 %v324
    %373 = vmatprep.subr.mxu0 0.0
    %374 = vmatpush1.msra.mxu0 %v323
    %375 = vmatprep.subr.mxu0 0.0
    %376 = vmatpush1.msra.mxu0 %v322
    %377 = vmatprep.subr.mxu0 0.0
    %378 = vmatpush2.msra.mxu0 0.0
    %379 = vmatprep.subr.mxu0 0.0
    %380 = vmatpush2.msra.mxu0 0.0
    %381 = vmatprep.subr.mxu0 0.0
    %382 = vmatpush2.msra.mxu0 0.0
    %383 = vmatprep.subr.mxu0 0.0
    %384 = vmatpush2.msra.mxu0 0.0
    %385 = vmatprep.subr.mxu0 0.0
    %386 = vmatpush2.msra.mxu0 0.0
    %387 = vmatprep.subr.mxu0 0.0
    %388 = vmatpush2.msra.mxu0 0.0
    %389 = vmatprep.subr.mxu0 0.0
    %390 = vmatpush2.msra.mxu0 0.0
    %391 = vmatprep.subr.mxu0 0.0
    %392 = vmatpush2.msra.mxu0 0.0
    %393 = vmatprep.subr.mxu0 0.0
    %394 = vmatpush2.msra.mxu0 0.0
    %395 = vmatprep.subr.mxu0 0.0
    %396 = vmatpush2.msra.mxu0 0.0
    %397 = vmatprep.subr.mxu0 0.0
    %398 = vmatpush2.msra.mxu0 0.0
    %399 = vmatprep.subr.mxu0 0.0
    %400 = vmatpush2.msra.mxu0 0.0
    %401 = vmatprep.subr.mxu0 0.0
    %402 = vmatpush2.msra.mxu0 0.0
    %403 = vmatprep.subr.mxu0 0.0
    %404 = vmatpush2.msra.mxu0 0.0
    %405 = vmatprep.subr.mxu0 0.0
    %406 = vmatpush2.msra.mxu0 0.0
    %407 = vmatprep.subr.mxu0 0.0
    %408 = vmatpush2.msra.mxu0 0.0
    %409 = vmatprep.mubr.f32.mxu0 0.0
    %410 = vmatmul.mubr.f32.gmra.mxu0 %v131
    %v411 = vpop.f32.mrf.mxu0
    %v412 = vadd.f32 %v343, %v411
    %v413 = vpop.f32.mrf.mxu0
    %414 = vdwg.mxu0
    %v415 = vadd.f32 %v319, %v412
    %416 = vadd.xlane.f32.xlu0 %v415
    %v417 = vpop.xlane.xlu0 %416
    %v418 = vmul.f32 %v417, 0.03125
    %v419 = vsub.f32 %v415, %v418
    %v420 = vmul.f32 %v419, %v419
    %v421 = vsel %vm134, 1, 0
    %vm422 = vcmp.eq.s32.totalorder %v421, 1
    %v423 = vsel %vm422, %v420, 0.0
    %424 = vadd.xlane.f32.xlu0 %v423
    %v425 = vpop.xlane.xlu0 %424
    %v426 = vmul.f32 %v425, 0.03125
    %v427 = vadd.f32 %v426, 1e-05
    %v428 = vrsqrt.pop %v427
    %v429 = vmul.f32 %v419, %v428
    %v430 = vld [vmem:[%s7] sm:$0x1]
    %v432 = vlaneseq
    %v433 = vshrl.u32 %v432, 7
    %v434 = vsub.s32 0, %v433
    %v435 = vrot.slane %v430, %v434
    %v437 = vmul.f32 %v429, %v435
    %v438 = vld [vmem:[%s8] sm:$0x1]
    %v440 = vlaneseq
    %v441 = vshrl.u32 %v440, 7
    %v442 = vsub.s32 0, %v441
    %v443 = vrot.slane %v438, %v442
    %v445 = vadd.f32 %v437, %v443
    %v446 = vld [vmem:[#allocation10] sm:$0xff]
    %v447 = vld [vmem:[#allocation10 + $0x8] sm:$0xff]
    %v448 = vld [vmem:[#allocation10 + $0x10] sm:$0xff]
    %v449 = vld [vmem:[#allocation10 + $0x18] sm:$0xff]
    %v450 = vld [vmem:[#allocation10 + $0x20] sm:$0xff]
    %v451 = vld [vmem:[#allocation10 + $0x28] sm:$0xff]
    %v452 = vld [vmem:[#allocation10 + $0x30] sm:$0xff]
    %v453 = vld [vmem:[#allocation10 + $0x38] sm:$0xff]
    %v454 = vld [vmem:[#allocation10 + $0x40] sm:$0xff]
    %v455 = vld [vmem:[#allocation10 + $0x48] sm:$0xff]
    %v456 = vld [vmem:[#allocation10 + $0x50] sm:$0xff]
    %v457 = vld [vmem:[#allocation10 + $0x58] sm:$0xff]
    %v458 = vld [vmem:[#allocation10 + $0x60] sm:$0xff]
    %v459 = vld [vmem:[#allocation10 + $0x68] sm:$0xff]
    %v460 = vld [vmem:[#allocation10 + $0x70] sm:$0xff]
    %v461 = vld [vmem:[#allocation10 + $0x78] sm:$0xff]
    %v462 = vld [vmem:[%s10] sm:$0x1]
    %v464 = vlaneseq
    %v465 = vshrl.u32 %v464, 7
    %v466 = vsub.s32 0, %v465
    %v467 = vrot.slane %v462, %v466
    %469 = vmatprep.subr.mxu0 0.0
    %470 = vmatpush1.msra.mxu0 %v461
    %471 = vmatprep.subr.mxu0 0.0
    %472 = vmatpush1.msra.mxu0 %v460
    %473 = vmatprep.subr.mxu0 0.0
    %474 = vmatpush1.msra.mxu0 %v459
    %475 = vmatprep.subr.mxu0 0.0
    %476 = vmatpush1.msra.mxu0 %v458
    %477 = vmatprep.subr.mxu0 0.0
    %478 = vmatpush1.msra.mxu0 %v457
    %479 = vmatprep.subr.mxu0 0.0
    %480 = vmatpush1.msra.mxu0 %v456
    %481 = vmatprep.subr.mxu0 0.0
    %482 = vmatpush1.msra.mxu0 %v455
    %483 = vmatprep.subr.mxu0 0.0
    %484 = vmatpush1.msra.mxu0 %v454
    %485 = vmatprep.subr.mxu0 0.0
    %486 = vmatpush1.msra.mxu0 %v453
    %487 = vmatprep.subr.mxu0 0.0
    %488 = vmatpush1.msra.mxu0 %v452
    %489 = vmatprep.subr.mxu0 0.0
    %490 = vmatpush1.msra.mxu0 %v451
    %491 = vmatprep.subr.mxu0 0.0
    %492 = vmatpush1.msra.mxu0 %v450
    %493 = vmatprep.subr.mxu0 0.0
    %494 = vmatpush1.msra.mxu0 %v449
    %495 = vmatprep.subr.mxu0 0.0
    %496 = vmatpush1.msra.mxu0 %v448
    %497 = vmatprep.subr.mxu0 0.0
    %498 = vmatpush1.msra.mxu0 %v447
    %499 = vmatprep.subr.mxu0 0.0
    %500 = vmatpush1.msra.mxu0 %v446
    %501 = vmatprep.subr.mxu0 0.0
    %502 = vmatpush2.msra.mxu0 0.0
    %503 = vmatprep.subr.mxu0 0.0
    %504 = vmatpush2.msra.mxu0 0.0
    %505 = vmatprep.subr.mxu0 0.0
    %506 = vmatpush2.msra.mxu0 0.0
    %507 = vmatprep.subr.mxu0 0.0
    %508 = vmatpush2.msra.mxu0 0.0
    %509 = vmatprep.subr.mxu0 0.0
    %510 = vmatpush2.msra.mxu0 0.0
    %511 = vmatprep.subr.mxu0 0.0
    %512 = vmatpush2.msra.mxu0 0.0
    %513 = vmatprep.subr.mxu0 0.0
    %514 = vmatpush2.msra.mxu0 0.0
    %515 = vmatprep.subr.mxu0 0.0
    %516 = vmatpush2.msra.mxu0 0.0
    %517 = vmatprep.subr.mxu0 0.0
    %518 = vmatpush2.msra.mxu0 0.0
    %519 = vmatprep.subr.mxu0 0.0
    %520 = vmatpush2.msra.mxu0 0.0
    %521 = vmatprep.subr.mxu0 0.0
    %522 = vmatpush2.msra.mxu0 0.0
    %523 = vmatprep.subr.mxu0 0.0
    %524 = vmatpush2.msra.mxu0 0.0
    %525 = vmatprep.subr.mxu0 0.0
    %526 = vmatpush2.msra.mxu0 0.0
    %527 = vmatprep.subr.mxu0 0.0
    %528 = vmatpush2.msra.mxu0 0.0
    %529 = vmatprep.subr.mxu0 0.0
    %530 = vmatpush2.msra.mxu0 0.0
    %531 = vmatprep.subr.mxu0 0.0
    %532 = vmatpush2.msra.mxu0 0.0
    %533 = vmatprep.mubr.f32.mxu0 0.0
    %534 = vmatmul.mubr.f32.gmra.mxu0 %v445
    %v535 = vpop.f32.mrf.mxu0
    %v536 = vadd.f32 %v467, %v535
    %v537 = vpop.f32.mrf.mxu0
    %538 = vdwg.mxu0
    %v539 = vmax.f32 %v536, 0.0
    %v540 = vld [vmem:[#allocation11] sm:$0xff]
    %v541 = vld [vmem:[#allocation11 + $0x8] sm:$0xff]
    %v542 = vld [vmem:[#allocation11 + $0x10] sm:$0xff]
    %v543 = vld [vmem:[#allocation11 + $0x18] sm:$0xff]
    %v544 = vld [vmem:[#allocation11 + $0x20] sm:$0xff]
    %v545 = vld [vmem:[#allocation11 + $0x28] sm:$0xff]
    %v546 = vld [vmem:[#allocation11 + $0x30] sm:$0xff]
    %v547 = vld [vmem:[#allocation11 + $0x38] sm:$0xff]
    %v548 = vld [vmem:[#allocation11 + $0x40] sm:$0xff]
    %v549 = vld [vmem:[#allocation11 + $0x48] sm:$0xff]
    %v550 = vld [vmem:[#allocation11 + $0x50] sm:$0xff]
    %v551 = vld [vmem:[#allocation11 + $0x58] sm:$0xff]
    %v552 = vld [vmem:[#allocation11 + $0x60] sm:$0xff]
    %v553 = vld [vmem:[#allocation11 + $0x68] sm:$0xff]
    %v554 = vld [vmem:[#allocation11 + $0x70] sm:$0xff]
    %v555 = vld [vmem:[#allocation11 + $0x78] sm:$0xff]
    %v556 = vld [vmem:[%s12] sm:$0x1]
    %v558 = vlaneseq
    %v559 = vshrl.u32 %v558, 7
    %v560 = vsub.s32 0, %v559
    %v561 = vrot.slane %v556, %v560
    %563 = vmatprep.subr.mxu0 0.0
    %564 = vmatpush1.msra.mxu0 %v555
    %565 = vmatprep.subr.mxu0 0.0
    %566 = vmatpush1.msra.mxu0 %v554
    %567 = vmatprep.subr.mxu0 0.0
    %568 = vmatpush1.msra.mxu0 %v553
    %569 = vmatprep.subr.mxu0 0.0
    %570 = vmatpush1.msra.mxu0 %v552
    %571 = vmatprep.subr.mxu0 0.0
    %572 = vmatpush1.msra.mxu0 %v551
    %573 = vmatprep.subr.mxu0 0.0
    %574 = vmatpush1.msra.mxu0 %v550
    %575 = vmatprep.subr.mxu0 0.0
    %576 = vmatpush1.msra.mxu0 %v549
    %577 = vmatprep.subr.mxu0 0.0
    %578 = vmatpush1.msra.mxu0 %v548
    %579 = vmatprep.subr.mxu0 0.0
    %580 = vmatpush1.msra.mxu0 %v547
    %581 = vmatprep.subr.mxu0 0.0
    %582 = vmatpush1.msra.mxu0 %v546
    %583 = vmatprep.subr.mxu0 0.0
    %584 = vmatpush1.msra.mxu0 %v545
    %585 = vmatprep.subr.mxu0 0.0
    %586 = vmatpush1.msra.mxu0 %v544
    %587 = vmatprep.subr.mxu0 0.0
    %588 = vmatpush1.msra.mxu0 %v543
    %589 = vmatprep.subr.mxu0 0.0
    %590 = vmatpush1.msra.mxu0 %v542
    %591 = vmatprep.subr.mxu0 0.0
    %592 = vmatpush1.msra.mxu0 %v541
    %593 = vmatprep.subr.mxu0 0.0
    %594 = vmatpush1.msra.mxu0 %v540
    %595 = vmatprep.subr.mxu0 0.0
    %596 = vmatpush2.msra.mxu0 0.0
    %597 = vmatprep.subr.mxu0 0.0
    %598 = vmatpush2.msra.mxu0 0.0
    %599 = vmatprep.subr.mxu0 0.0
    %600 = vmatpush2.msra.mxu0 0.0
    %601 = vmatprep.subr.mxu0 0.0
    %602 = vmatpush2.msra.mxu0 0.0
    %603 = vmatprep.subr.mxu0 0.0
    %604 = vmatpush2.msra.mxu0 0.0
    %605 = vmatprep.subr.mxu0 0.0
    %606 = vmatpush2.msra.mxu0 0.0
    %607 = vmatprep.subr.mxu0 0.0
    %608 = vmatpush2.msra.mxu0 0.0
    %609 = vmatprep.subr.mxu0 0.0
    %610 = vmatpush2.msra.mxu0 0.0
    %611 = vmatprep.subr.mxu0 0.0
    %612 = vmatpush2.msra.mxu0 0.0
    %613 = vmatprep.subr.mxu0 0.0
    %614 = vmatpush2.msra.mxu0 0.0
    %615 = vmatprep.subr.mxu0 0.0
    %616 = vmatpush2.msra.mxu0 0.0
    %617 = vmatprep.subr.mxu0 0.0
    %618 = vmatpush2.msra.mxu0 0.0
    %619 = vmatprep.subr.mxu0 0.0
    %620 = vmatpush2.msra.mxu0 0.0
    %621 = vmatprep.subr.mxu0 0.0
    %622 = vmatpush2.msra.mxu0 0.0
    %623 = vmatprep.subr.mxu0 0.0
    %624 = vmatpush2.msra.mxu0 0.0
    %625 = vmatprep.subr.mxu0 0.0
    %626 = vmatpush2.msra.mxu0 0.0
    %627 = vmatprep.mubr.f32.mxu0 0.0
    %628 = vmatmul.mubr.f32.gmra.mxu0 %v539
    %v629 = vpop.f32.mrf.mxu0
    %v630 = vadd.f32 %v561, %v629
    %v631 = vpop.f32.mrf.mxu0
    %632 = vdwg.mxu0
    %v633 = vadd.f32 %v630, %v445
    %634 = vadd.xlane.f32.xlu0 %v633
    %v635 = vpop.xlane.xlu0 %634
    %v636 = vmul.f32 %v635, 0.03125
    %v637 = vsub.f32 %v633, %v636
    %v638 = vmul.f32 %v637, %v637
    %v639 = vsel %vm422, %v638, 0.0
    %640 = vadd.xlane.f32.xlu0 %v639
    %v641 = vpop.xlane.xlu0 %640
    %v642 = vmul.f32 %v641, 0.03125
    %v643 = vadd.f32 %v642, 1e-05
    %v644 = vrsqrt.pop %v643
    %v645 = vmul.f32 %v637, %v644
    %v646 = vld [vmem:[%s13] sm:$0x1]
    %v648 = vlaneseq
    %v649 = vshrl.u32 %v648, 7
    %v650 = vsub.s32 0, %v649
    %v651 = vrot.slane %v646, %v650
    %v653 = vmul.f32 %v645, %v651
    %v654 = vld [vmem:[%s14] sm:$0x1]
    %v656 = vlaneseq
    %v657 = vshrl.u32 %v656, 7
    %v658 = vsub.s32 0, %v657
    %v659 = vrot.slane %v654, %v658
    %v661 = vadd.f32 %v653, %v659
    %662 = vst [vmem:[#allocation13] sm:$0xff] %v661
    // Predicated region
    $region86: #{tpu_custom_call.1} parent=1 // pred_check
      _
    $region87: #{tpu_custom_call.1} parent=1 // pred_check_branch
      %664 = sbr.rel (0) target = $region89
    $region88: #{tpu_custom_call.1} parent=1 // pred_region
      %s666 = ssub.s32 128, 128
      %667 = vsyncadd [#allocation4], %s666
      %s669 = sshll.u32 [#allocation13], 4
      %s670 = int_to_ptr.vmem [resolvable:$true] %s669
      %672 = dma.vmem_to_hbm [thread:$0]  %s670, 128, %s15, [#allocation4]
    $region89: #{tpu_custom_call.1} parent=1 // pred_fallthru
      _
    // Predicated region
    $region90: #{tpu_custom_call.1} parent=1 // pred_check
      _
    $region91: #{tpu_custom_call.1} parent=1 // pred_check_branch
      %674 = sbr.rel (0) target = $region93
    $region92: #{tpu_custom_call.1} parent=1 // pred_region
      %675 = dma.done [#allocation4], 128
    $region93: #{tpu_custom_call.1} parent=1 // pred_fallthru
      _
    %676 = vsyncpa [#allocation3], 1
    %677 = vsyncpa [#allocation6], 1
    %678 = vsyncpa [#allocation9], 1
    %679 = vsyncpa [#allocation12], 1
    %680 = vsyncpa [#allocation4], 1

</llo_original>
